<compile_context>
chip_gen: v6e
topology: v6e:2x2x1
jax: 0.10.0
libtpu: 0.0.40
codegen_flags: <defaults>
</compile_context>

<pallas_src>
import functools

import jax
import jax.numpy as jnp
from jax.experimental import pallas as pl
from jax.experimental.pallas import tpu as pltpu


LEAKY_SLOPE = 0.01   # nn.LeakyReLU default
BN_EPS = 1e-5        # nn.BatchNorm1d default


def _round_up(x, m):
    return ((x + m - 1) // m) * m


# ---------------------------------------------------------------------------
# Pallas kernels
# ---------------------------------------------------------------------------

def _fused_mlp_kernel(x_ref, w1_ref, b1_ref, w2_ref, b2_ref, o_ref, *, neg_slope):
    """out = leaky_relu(x @ w1 + b1, neg_slope) @ w2 + b2 (BN pre-folded)."""
    h = jnp.dot(x_ref[...], w1_ref[...], preferred_element_type=jnp.float32)
    h = h + b1_ref[...]                                # f32 epilogue
    h = jnp.where(h >= 0, h, neg_slope * h)            # LeakyReLU / ReLU
    out = jnp.dot(h.astype(w2_ref.dtype), w2_ref[...],
                  preferred_element_type=jnp.float32)
    out = out + b2_ref[...]
    o_ref[...] = out.astype(o_ref.dtype)


def _linear_kernel(x_ref, w_ref, b_ref, o_ref):
    out = jnp.dot(x_ref[...], w_ref[...], preferred_element_type=jnp.float32)
    o_ref[...] = (out + b_ref[...]).astype(o_ref.dtype)


# ---------------------------------------------------------------------------
# Wrappers around pallas_call
# ---------------------------------------------------------------------------

def fused_mlp(x, w1, b1, w2, b2, *, neg_slope=0.0, tile_b=1024,
              compute_dtype=jnp.float32):
    """Tiled fused two-layer MLP. x: (N, in_dim) -> (N, out_dim) f32."""
    N, in_dim = x.shape
    hidden = w1.shape[1]
    out_dim = w2.shape[1]

    # Pad hidden dim to a full 128-lane multiple: zero w1 columns / b1 entries
    # produce h=0, leaky_relu(0)=0, and zero w2 rows contribute nothing.
    hid_pad = _round_up(hidden, 128)
    if hid_pad != hidden:
        w1 = jnp.pad(w1, ((0, 0), (0, hid_pad - hidden)))
        b1 = jnp.pad(b1, (0, hid_pad - hidden))
        w2 = jnp.pad(w2, ((0, hid_pad - hidden), (0, 0)))
        hidden = hid_pad

    # Large batch tiles (HBM-bandwidth bound); cdiv + zero-pad for arbitrary N.
    tile = min(tile_b, _round_up(N, 8))
    n_pad = _round_up(N, tile)
    if n_pad != N:
        x = jnp.pad(x, ((0, n_pad - N), (0, 0)))

    x = x.astype(compute_dtype)
    w1 = w1.astype(compute_dtype)
    w2 = w2.astype(compute_dtype)
    b1 = b1.reshape(1, hidden).astype(jnp.float32)
    b2 = b2.reshape(1, out_dim).astype(jnp.float32)

    grid = (n_pad // tile,)
    out = pl.pallas_call(
        functools.partial(_fused_mlp_kernel, neg_slope=neg_slope),
        out_shape=jax.ShapeDtypeStruct((n_pad, out_dim), jnp.float32),
        grid_spec=pltpu.PrefetchScalarGridSpec(
            num_scalar_prefetch=0,
            grid=grid,
            in_specs=[
                pl.BlockSpec((tile, in_dim), lambda i: (i, 0)),     # x tile
                pl.BlockSpec((in_dim, hidden), lambda i: (0, 0)),   # w1 (resident)
                pl.BlockSpec((1, hidden), lambda i: (0, 0)),        # b1
                pl.BlockSpec((hidden, out_dim), lambda i: (0, 0)),  # w2 (resident)
                pl.BlockSpec((1, out_dim), lambda i: (0, 0)),       # b2
            ],
            out_specs=pl.BlockSpec((tile, out_dim), lambda i: (i, 0)),
        ),
        compiler_params=pltpu.CompilerParams(
            dimension_semantics=("parallel",)),
    )(x, w1, b1, w2, b2)
    return out[:N]


def linear_forward(x, w, b, *, tile_b=1024, compute_dtype=jnp.float32):
    """Tiled y = x @ w + b. x: (N, in_dim) -> (N, out_dim) f32."""
    N, in_dim = x.shape
    out_dim = w.shape[1]

    tile = min(tile_b, _round_up(N, 8))
    n_pad = _round_up(N, tile)
    if n_pad != N:
        x = jnp.pad(x, ((0, n_pad - N), (0, 0)))

    x = x.astype(compute_dtype)
    w = w.astype(compute_dtype)
    b2d = b.reshape(1, out_dim).astype(jnp.float32)

    grid = (n_pad // tile,)
    out = pl.pallas_call(
        _linear_kernel,
        out_shape=jax.ShapeDtypeStruct((n_pad, out_dim), jnp.float32),
        grid_spec=pltpu.PrefetchScalarGridSpec(
            num_scalar_prefetch=0,
            grid=grid,
            in_specs=[
                pl.BlockSpec((tile, in_dim), lambda i: (i, 0)),
                pl.BlockSpec((in_dim, out_dim), lambda i: (0, 0)),
                pl.BlockSpec((1, out_dim), lambda i: (0, 0)),
            ],
            out_specs=pl.BlockSpec((tile, out_dim), lambda i: (i, 0)),
        ),
        compiler_params=pltpu.CompilerParams(
            dimension_semantics=("parallel",)),
    )(x, w, b2d)
    return out[:N]


def fold_bn_into_linear(w, b, gamma, beta, run_mean, run_var, eps=BN_EPS):
    """Fold inference-mode BatchNorm1d into the preceding Linear."""
    inv = gamma / jnp.sqrt(run_var + eps)
    return w * inv[None, :], (b - run_mean) * inv + beta


# ---------------------------------------------------------------------------
# Module forwards
# ---------------------------------------------------------------------------

def ge_encoder_forward(ge, p, *, tile_b=1024, compute_dtype=jnp.float32):
    w1_eff, b1_eff = fold_bn_into_linear(
        p["w1"], p["b1"], p["gamma"], p["beta"], p["run_mean"], p["run_var"])
    # Dropout is identity in inference mode.
    return fused_mlp(ge, w1_eff, b1_eff, p["w2"], p["b2"],
                     neg_slope=LEAKY_SLOPE, tile_b=tile_b,
                     compute_dtype=compute_dtype)


def graph_encoder_forward(x, edge_index, edge_attr, batch, num_graphs, p,
                          *, tile_b=1024, compute_dtype=jnp.float32):
    src, dst = edge_index[0], edge_index[1]
    for i in range(len(p["convs"])):
        el = p["edge_lins"][i]
        e_t = linear_forward(edge_attr, el["w"], el["b"],
                             tile_b=tile_b, compute_dtype=compute_dtype)
        # GINEConv (eps=0): aggr = sum_{j->i} relu(x_j + e_ji); h = x + aggr.
        # TODO(synk): data-dependent gather / scatter-add done in plain JAX
        # (no block-rectangular Pallas equivalent).
        msg = jnp.maximum(x[src] + e_t, 0.0)
        agg = jnp.zeros_like(x).at[dst].add(msg)
        h = x + agg

        c = p["convs"][i]
        w1_eff, b1_eff = fold_bn_into_linear(
            c["w1"], c["b1"], c["gamma"], c["beta"], c["run_mean"], c["run_var"])
        x = fused_mlp(h, w1_eff, b1_eff, c["w2"], c["b2"], neg_slope=0.0,
                      tile_b=tile_b, compute_dtype=compute_dtype)
        # F.dropout (identity in eval) then ReLU.
        x = jnp.maximum(x, 0.0)

    # scatter(x, batch, reduce='mean') — data-dependent pooling in plain JAX.
    sums = jnp.zeros((num_graphs, x.shape[1]), x.dtype).at[batch].add(x)
    counts = jnp.zeros((num_graphs, 1), x.dtype).at[batch].add(1.0)
    pooled = sums / jnp.maximum(counts, 1.0)

    ol = p["out_lin"]
    return fused_mlp(pooled, ol["w1"], ol["b1"], ol["w2"], ol["b2"],
                     neg_slope=0.0, tile_b=tile_b, compute_dtype=compute_dtype)


def joint_graph_encoder_forward(graph, ge, params, *, tile_b=1024,
                                compute_dtype=jnp.float32):
    g_emb = graph_encoder_forward(
        graph["x"], graph["edge_index"], graph["edge_attr"], graph["batch"],
        graph["num_graphs"], params["graph_encoder"],
        tile_b=tile_b, compute_dtype=compute_dtype)
    ge_emb = ge_encoder_forward(ge, params["ge_encoder"],
                                tile_b=tile_b, compute_dtype=compute_dtype)
    z = jnp.concatenate([g_emb, ge_emb], axis=-1)
    enc = params["encoder"]
    return fused_mlp(z, enc["w1"], enc["b1"], enc["w2"], enc["b2"],
                     neg_slope=LEAKY_SLOPE, tile_b=tile_b,
                     compute_dtype=compute_dtype)


# ---------------------------------------------------------------------------
# Pure-JAX reference (inference semantics)
# ---------------------------------------------------------------------------

def _leaky(x, slope):
    return jnp.where(x >= 0, x, slope * x)


def _bn(x, gamma, beta, mean, var):
    return (x - mean) / jnp.sqrt(var + BN_EPS) * gamma + beta


def joint_graph_encoder_ref(graph, ge, p):
    x, ei, ea = graph["x"], graph["edge_index"], graph["edge_attr"]
    batch, G = graph["batch"], graph["num_graphs"]
    gp = p["graph_encoder"]
    src, dst = ei[0], ei[1]
    for i in range(len(gp["convs"])):
        el = gp["edge_lins"][i]
        e_t = ea @ el["w"] + el["b"]
        msg = jnp.maximum(x[src] + e_t, 0.0)
        agg = jnp.zeros_like(x).at[dst].add(msg)
        h = x + agg
        c = gp["convs"][i]
        hh = h @ c["w1"] + c["b1"]
        hh = _bn(hh, c["gamma"], c["beta"], c["run_mean"], c["run_var"])
        hh = jnp.maximum(hh, 0.0)
        x = hh @ c["w2"] + c["b2"]
        x = jnp.maximum(x, 0.0)
    sums = jnp.zeros((G, x.shape[1]), x.dtype).at[batch].add(x)
    counts = jnp.zeros((G, 1), x.dtype).at[batch].add(1.0)
    pooled = sums / counts
    ol = gp["out_lin"]
    g_emb = jnp.maximum(pooled @ ol["w1"] + ol["b1"], 0.0) @ ol["w2"] + ol["b2"]

    q = p["ge_encoder"]
    hh = ge @ q["w1"] + q["b1"]
    hh = _bn(hh, q["gamma"], q["beta"], q["run_mean"], q["run_var"])
    hh = _leaky(hh, LEAKY_SLOPE)
    ge_emb = hh @ q["w2"] + q["b2"]

    z = jnp.concatenate([g_emb, ge_emb], axis=-1)
    enc = p["encoder"]
    return _leaky(z @ enc["w1"] + enc["b1"], LEAKY_SLOPE) @ enc["w2"] + enc["b2"]


# ---------------------------------------------------------------------------
# Deterministic synthetic parameters / inputs
# ---------------------------------------------------------------------------

def _linear_init(key, fan_in, fan_out):
    kw, kb = jax.random.split(key)
    bound = 1.0 / jnp.sqrt(fan_in)
    w = jax.random.uniform(kw, (fan_in, fan_out), jnp.float32, -bound, bound)
    b = jax.random.uniform(kb, (fan_out,), jnp.float32, -bound, bound)
    return w, b


def _bn_init(key, dim):
    k1, k2, k3, k4 = jax.random.split(key, 4)
    return dict(
        gamma=jax.random.uniform(k1, (dim,), jnp.float32, 0.5, 1.5),
        beta=jax.random.uniform(k2, (dim,), jnp.float32, -0.5, 0.5),
        run_mean=jax.random.uniform(k3, (dim,), jnp.float32, -0.5, 0.5),
        run_var=jax.random.uniform(k4, (dim,), jnp.float32, 0.5, 1.5),
    )


def init_params(key, *, num_node_features, num_edge_features, n_layers,
                hid_dim, out_dim, ge_in_dim=64):
    keys = iter(jax.random.split(key, 4 * n_layers + 8))

    edge_lins, convs = [], []
    for i in range(n_layers):
        e_out = num_node_features if i == 0 else hid_dim
        c_in = num_node_features if i == 0 else hid_dim
        ew, eb = _linear_init(next(keys), num_edge_features, e_out)
        edge_lins.append({"w": ew, "b": eb})
        w1, b1 = _linear_init(next(keys), c_in, hid_dim)
        w2, b2 = _linear_init(next(keys), hid_dim, hid_dim)
        convs.append({"w1": w1, "b1": b1, "w2": w2, "b2": b2,
                      **_bn_init(next(keys), hid_dim)})

    ow1, ob1 = _linear_init(next(keys), hid_dim, out_dim)
    ow2, ob2 = _linear_init(next(keys), out_dim, out_dim)

    gw1, gb1 = _linear_init(next(keys), ge_in_dim, 64)
    gw2, gb2 = _linear_init(next(keys), 64, out_dim)
    ge_bn = _bn_init(next(keys), 64)

    jw1, jb1 = _linear_init(next(keys), 2 * out_dim, 2 * out_dim)
    jw2, jb2 = _linear_init(next(keys), 2 * out_dim, out_dim)

    return {
        "graph_encoder": {
            "edge_lins": edge_lins,
            "convs": convs,
            "out_lin": {"w1": ow1, "b1": ob1, "w2": ow2, "b2": ob2},
        },
        "ge_encoder": {"w1": gw1, "b1": gb1, "w2": gw2, "b2": gb2, **ge_bn},
        "encoder": {"w1": jw1, "b1": jb1, "w2": jw2, "b2": jb2},
    }


if __name__ == "__main__":
    num_node_features, num_edge_features = 16, 8
    n_layers, hid_dim, out_dim = 2, 32, 32
    num_graphs, nodes_per_graph, edges_per_graph = 3, 8, 16
    num_nodes = num_graphs * nodes_per_graph

    key = jax.random.PRNGKey(0)
    kp, kx, ke, ka, kg = jax.random.split(key, 5)

    params = init_params(kp, num_node_features=num_node_features,
                         num_edge_features=num_edge_features,
                         n_layers=n_layers, hid_dim=hid_dim, out_dim=out_dim)

    x = jax.random.normal(kx, (num_nodes, num_node_features), jnp.float32)
    e_local = jax.random.randint(ke, (2, num_graphs, edges_per_graph),
                                 0, nodes_per_graph)
    offsets = (jnp.arange(num_graphs) * nodes_per_graph)[None, :, None]
    edge_index = (e_local + offsets).reshape(2, -1)
    edge_attr = jax.random.normal(
        ka, (num_graphs * edges_per_graph, num_edge_features), jnp.float32)
    batch = jnp.repeat(jnp.arange(num_graphs), nodes_per_graph)
    ge = jax.random.normal(kg, (num_graphs, 64), jnp.float32)

    graph = {"x": x, "edge_index": edge_index, "edge_attr": edge_attr,
             "batch": batch, "num_graphs": num_graphs}

    # f32 path: strict correctness check vs pure-JAX reference.
    out = joint_graph_encoder_forward(graph, ge, params)
    out = jax.block_until_ready(out)
    ref = joint_graph_encoder_ref(graph, ge, params)
    assert out.shape == (num_graphs, out_dim)
    assert jnp.allclose(out, ref, atol=1e-4, rtol=1e-4), (
        "mismatch vs reference, max abs diff "
        f"{float(jnp.max(jnp.abs(out - ref)))}")

    # bf16 compute path (v6e/v7x recommendation): halves dominant HBM read
    # traffic; f32 MXU accumulation and f32 epilogue keep numerics sane.
    out_bf16 = jax.block_until_ready(
        joint_graph_encoder_forward(graph, ge, params,
                                    compute_dtype=jnp.bfloat16))
    assert out_bf16.shape == (num_graphs, out_dim)
    assert bool(jnp.all(jnp.isfinite(out_bf16)))

    print("KERNEL_OK")
</pallas_src>

<mosaic_0001>
module attributes {stable_mosaic.version = 11 : i64} {
  func.func @_linear_kernel(%arg0: i32, %arg1: memref<48x8xf32, #tpu.memory_space<vmem>>, %arg2: memref<8x16xf32, #tpu.memory_space<vmem>>, %arg3: memref<1x16xf32, #tpu.memory_space<vmem>>, %arg4: memref<48x16xf32, #tpu.memory_space<vmem>>) attributes {dimension_semantics = [#tpu.dimension_semantics<parallel>], iteration_bounds = array<i64: 1>, scalar_prefetch = 0 : i64, scratch_operands = 0 : i64, tpu.core_type = #tpu.core_type<tc>, window_params = [{transform_indices = @transform_0, window_bounds = array<i64: 48, 8>}, {pipeline_mode = #tpu.pipeline_mode<synchronous>, transform_indices = @transform_1, window_bounds = array<i64: 8, 16>}, {pipeline_mode = #tpu.pipeline_mode<synchronous>, transform_indices = @transform_2, window_bounds = array<i64: 1, 16>}, {transform_indices = @transform_3, window_bounds = array<i64: 48, 16>}]} {
    %c0 = arith.constant 0 : index
    %c0_0 = arith.constant 0 : index
    %0 = vector.load %arg1[%c0, %c0_0] : memref<48x8xf32, #tpu.memory_space<vmem>>, vector<48x8xf32>
    %c0_1 = arith.constant 0 : index
    %c0_2 = arith.constant 0 : index
    %1 = vector.load %arg2[%c0_1, %c0_2] : memref<8x16xf32, #tpu.memory_space<vmem>>, vector<8x16xf32>
    %cst = arith.constant dense<0.000000e+00> : vector<48x16xf32>
    %2 = tpu.matmul %0, %1, %cst {dimension_numbers = #tpu.dot_dimension_numbers<[1], [0], [0], [1], [0, 0, 1, 1], [], []>} : vector<48x8xf32>, vector<8x16xf32>, vector<48x16xf32> -> vector<48x16xf32>
    %c0_3 = arith.constant 0 : index
    %c0_4 = arith.constant 0 : index
    %3 = vector.load %arg3[%c0_3, %c0_4] : memref<1x16xf32, #tpu.memory_space<vmem>>, vector<1x16xf32>
    %4 = vector.broadcast %3 : vector<1x16xf32> to vector<48x16xf32>
    %5 = arith.addf %2, %4 : vector<48x16xf32>
    %c0_5 = arith.constant 0 : index
    %c0_6 = arith.constant 0 : index
    %6 = vector.load %arg4[%c0_5, %c0_6] : memref<48x16xf32, #tpu.memory_space<vmem>>, vector<48x16xf32>
    tpu.vector_store %arg4[%c0_5, %c0_6], %5 {strides = array<i32>} : memref<48x16xf32, #tpu.memory_space<vmem>>, vector<48x16xf32>,
    return
  }
  func.func @transform_0(%arg0: i32) -> (i32, i32) {
    %c0_i32 = arith.constant 0 : i32
    %c0_i32_0 = arith.constant 0 : i32
    return %arg0, %c0_i32 : i32, i32
  }
  func.func @transform_1(%arg0: i32) -> (i32, i32) {
    %c0_i32 = arith.constant 0 : i32
    %c0_i32_0 = arith.constant 0 : i32
    %c0_i32_1 = arith.constant 0 : i32
    return %c0_i32, %c0_i32_0 : i32, i32
  }
  func.func @transform_2(%arg0: i32) -> (i32, i32) {
    %c0_i32 = arith.constant 0 : i32
    %c0_i32_0 = arith.constant 0 : i32
    %c0_i32_1 = arith.constant 0 : i32
    return %c0_i32, %c0_i32_0 : i32, i32
  }
  func.func @transform_3(%arg0: i32) -> (i32, i32) {
    %c0_i32 = arith.constant 0 : i32
    %c0_i32_0 = arith.constant 0 : i32
    return %arg0, %c0_i32 : i32, i32
  }
}

</mosaic_0001>

<llo_original>
// kernel: tpu_custom_call.1
$region0: #{tpu_custom_call.1}
  #allocation0 [shape = 'u32[]', space=smem, size = 0x4, offset = 0x4, fixed_abs, tag = 'smem constant byte address 0x4 - core index']
  #allocation1 [shape = 'u32[144,128]{1,0:T(1,128)}', space=vmem, size = 0x12000, scoped, tag = 'internal scratch']
  %s0 = inlined_call_operand.vmem [shape: f32[48,8], index: 0, kind: input, shape index: {}]
  %s1 = inlined_call_operand.vmem [shape: f32[8,16], index: 1, kind: input, shape index: {}]
  %s2 = inlined_call_operand.vmem [shape: f32[1,16], index: 2, kind: input, shape index: {}]
  %s3 = inlined_call_operand.vmem [shape: f32[48,16], index: 3, kind: output, shape index: {}]
  %s4 = sld [smem:[#allocation0]]
  $region22: #{tpu_custom_call.1} parent=0
    _
  %s6 = ssub.s32 1, %s4
  %s7 = scalar_select 0, %s6, %s4
  // Predicated region
  $region2: #{tpu_custom_call.1} parent=0 // pred_check
    _
  $region3: #{tpu_custom_call.1} parent=0 // pred_check_branch
    %9 = sbr.rel (0) target = $region5
  $region4: #{tpu_custom_call.1} parent=0 // pred_region
    _
  $region5: #{tpu_custom_call.1} parent=0 // pred_fallthru
    _
  // Predicated region
  $region6: #{tpu_custom_call.1} parent=0 // pred_check
    _
  $region7: #{tpu_custom_call.1} parent=0 // pred_check_branch
    %11 = sbr.rel (0) target = $region9
  $region8: #{tpu_custom_call.1} parent=0 // pred_region
    _
  $region9: #{tpu_custom_call.1} parent=0 // pred_fallthru
    _
  // Predicated region
  $region10: #{tpu_custom_call.1} parent=0 // pred_check
    _
  $region11: #{tpu_custom_call.1} parent=0 // pred_check_branch
    %13 = sbr.rel (0) target = $region13
  $region12: #{tpu_custom_call.1} parent=0 // pred_region
    _
  $region13: #{tpu_custom_call.1} parent=0 // pred_fallthru
    _
  %v14 = vld [vmem:[%s0] sm:$0xff]
  %v15 = vld [vmem:[%s0 + $0x8] sm:$0xff]
  %v16 = vld [vmem:[%s0 + $0x10] sm:$0xff]
  %v17 = vld [vmem:[%s0 + $0x18] sm:$0xff]
  %v18 = vld [vmem:[%s0 + $0x20] sm:$0xff]
  %v19 = vld [vmem:[%s0 + $0x28] sm:$0xff]
  %v20 = vld [vmem:[%s1] sm:$0xff]
  %v21 = vld [vmem:[%s2] sm:$0x1]
  %v23 = vlaneseq
  %v24 = vshrl.u32 %v23, 7
  %v25 = vsub.s32 0, %v24
  %v26 = vrot.slane %v21, %v25
  %vm28 = vcmask 64512
  %v30 = vsel %vm28, %v14, 0
  %v33 = vsel %vm28, %v15, 0
  %v36 = vsel %vm28, %v16, 0
  %v39 = vsel %vm28, %v17, 0
  %v42 = vsel %vm28, %v18, 0
  %v45 = vsel %vm28, %v19, 0
  %47 = vmatprep.subr.mxu0 0.0
  %48 = vmatpush1.msra.mxu0 0.0
  %49 = vmatprep.subr.mxu0 0.0
  %50 = vmatpush1.msra.mxu0 0.0
  %51 = vmatprep.subr.mxu0 0.0
  %52 = vmatpush1.msra.mxu0 0.0
  %53 = vmatprep.subr.mxu0 0.0
  %54 = vmatpush1.msra.mxu0 0.0
  %55 = vmatprep.subr.mxu0 0.0
  %56 = vmatpush1.msra.mxu0 0.0
  %57 = vmatprep.subr.mxu0 0.0
  %58 = vmatpush1.msra.mxu0 0.0
  %59 = vmatprep.subr.mxu0 0.0
  %60 = vmatpush1.msra.mxu0 0.0
  %61 = vmatprep.subr.mxu0 0.0
  %62 = vmatpush1.msra.mxu0 0.0
  %63 = vmatprep.subr.mxu0 0.0
  %64 = vmatpush1.msra.mxu0 0.0
  %65 = vmatprep.subr.mxu0 0.0
  %66 = vmatpush1.msra.mxu0 0.0
  %67 = vmatprep.subr.mxu0 0.0
  %68 = vmatpush1.msra.mxu0 0.0
  %69 = vmatprep.subr.mxu0 0.0
  %70 = vmatpush1.msra.mxu0 0.0
  %71 = vmatprep.subr.mxu0 0.0
  %72 = vmatpush1.msra.mxu0 0.0
  %73 = vmatprep.subr.mxu0 0.0
  %74 = vmatpush1.msra.mxu0 0.0
  %75 = vmatprep.subr.mxu0 0.0
  %76 = vmatpush1.msra.mxu0 0.0
  %77 = vmatprep.subr.mxu0 0.0
  %78 = vmatpush1.msra.mxu0 %v20
  %79 = vmatprep.subr.mxu0 0.0
  %80 = vmatpush2.msra.mxu0 0.0
  %81 = vmatprep.subr.mxu0 0.0
  %82 = vmatpush2.msra.mxu0 0.0
  %83 = vmatprep.subr.mxu0 0.0
  %84 = vmatpush2.msra.mxu0 0.0
  %85 = vmatprep.subr.mxu0 0.0
  %86 = vmatpush2.msra.mxu0 0.0
  %87 = vmatprep.subr.mxu0 0.0
  %88 = vmatpush2.msra.mxu0 0.0
  %89 = vmatprep.subr.mxu0 0.0
  %90 = vmatpush2.msra.mxu0 0.0
  %91 = vmatprep.subr.mxu0 0.0
  %92 = vmatpush2.msra.mxu0 0.0
  %93 = vmatprep.subr.mxu0 0.0
  %94 = vmatpush2.msra.mxu0 0.0
  %95 = vmatprep.subr.mxu0 0.0
  %96 = vmatpush2.msra.mxu0 0.0
  %97 = vmatprep.subr.mxu0 0.0
  %98 = vmatpush2.msra.mxu0 0.0
  %99 = vmatprep.subr.mxu0 0.0
  %100 = vmatpush2.msra.mxu0 0.0
  %101 = vmatprep.subr.mxu0 0.0
  %102 = vmatpush2.msra.mxu0 0.0
  %103 = vmatprep.subr.mxu0 0.0
  %104 = vmatpush2.msra.mxu0 0.0
  %105 = vmatprep.subr.mxu0 0.0
  %106 = vmatpush2.msra.mxu0 0.0
  %107 = vmatprep.subr.mxu0 0.0
  %108 = vmatpush2.msra.mxu0 0.0
  %109 = vmatprep.subr.mxu0 0.0
  %110 = vmatpush2.msra.mxu0 0.0
  %111 = vmatprep.mubr.f32.mxu0 0.0
  %112 = vmatmul.mubr.f32.gmra.mxu0 %v30
  %v113 = vpop.f32.mrf.mxu0
  %v114 = vadd.f32 %v26, %v113
  %v115 = vpop.f32.mrf.mxu0
  %116 = vmatprep.mubr.f32.mxu0 0.0
  %117 = vmatmul.mubr.f32.gmra.mxu0 %v33
  %v118 = vpop.f32.mrf.mxu0
  %v119 = vadd.f32 %v26, %v118
  %v120 = vpop.f32.mrf.mxu0
  %121 = vmatprep.mubr.f32.mxu0 0.0
  %122 = vmatmul.mubr.f32.gmra.mxu0 %v36
  %v123 = vpop.f32.mrf.mxu0
  %v124 = vadd.f32 %v26, %v123
  %v125 = vpop.f32.mrf.mxu0
  %126 = vmatprep.mubr.f32.mxu0 0.0
  %127 = vmatmul.mubr.f32.gmra.mxu0 %v39
  %v128 = vpop.f32.mrf.mxu0
  %v129 = vadd.f32 %v26, %v128
  %v130 = vpop.f32.mrf.mxu0
  %131 = vmatprep.mubr.f32.mxu0 0.0
  %132 = vmatmul.mubr.f32.gmra.mxu0 %v42
  %v133 = vpop.f32.mrf.mxu0
  %v134 = vadd.f32 %v26, %v133
  %v135 = vpop.f32.mrf.mxu0
  %136 = vmatprep.mubr.f32.mxu0 0.0
  %137 = vmatmul.mubr.f32.gmra.mxu0 %v45
  %v138 = vpop.f32.mrf.mxu0
  %v139 = vadd.f32 %v26, %v138
  %v140 = vpop.f32.mrf.mxu0
  %141 = vdwg.mxu0
  %vm142 = vcmask 130048
  %143 = vst.msk [vmem:[%s3] sm:$0xff] %vm142, %v114
  %144 = vst.msk [vmem:[%s3 + $0x8] sm:$0xff] %vm142, %v119
  %145 = vst.msk [vmem:[%s3 + $0x10] sm:$0xff] %vm142, %v124
  %146 = vst.msk [vmem:[%s3 + $0x18] sm:$0xff] %vm142, %v129
  %147 = vst.msk [vmem:[%s3 + $0x20] sm:$0xff] %vm142, %v134
  %148 = vst.msk [vmem:[%s3 + $0x28] sm:$0xff] %vm142, %v139
  // Predicated region
  $region14: #{tpu_custom_call.1} parent=0 // pred_check
    _
  $region15: #{tpu_custom_call.1} parent=0 // pred_check_branch
    %150 = sbr.rel (0) target = $region17
  $region16: #{tpu_custom_call.1} parent=0 // pred_region
    _
  $region17: #{tpu_custom_call.1} parent=0 // pred_fallthru
    _
  // Predicated region
  $region18: #{tpu_custom_call.1} parent=0 // pred_check
    _
  $region19: #{tpu_custom_call.1} parent=0 // pred_check_branch
    %152 = sbr.rel (0) target = $region21
  $region20: #{tpu_custom_call.1} parent=0 // pred_region
    _
  $region21: #{tpu_custom_call.1} parent=0 // pred_fallthru
    _

</llo_original>
